<compile_context>
chip_gen: v6e
topology: v6e:2x2x1
jax: 0.10.0
libtpu: 0.0.40
codegen_flags: <defaults>
</compile_context>

<pallas_src>
import jax
import jax.numpy as jnp
from jax.experimental import pallas as pl
from jax.experimental.pallas import tpu as pltpu


def _feature_agg_kernel(x_ref, wqv_ref, wc_ref, bc_ref, wa_ref, ba_ref, out_ref):
    TB, N, twoD = x_ref.shape
    D = twoD // 2
    M = TB * N

    x = x_ref[...]                                   # (TB, N, 2D) f32
    x2 = x.reshape(M, twoD)
    xm = x2.astype(wqv_ref.dtype)                    # matmul operand dtype (bf16/f32)

    # Fused q/v projection: one (M, 2D) @ (2D, 2D) matmul, f32 accumulation.
    qv = jnp.dot(xm, wqv_ref[...], preferred_element_type=jnp.float32)   # (M, 2D)
    q = qv[:, :D]                                    # 128-lane-aligned slices (free)
    v = qv[:, D:]

    # cat(v, q*v) @ Wc^T + bc  as a single (M, 2D) @ (2D, D) matmul.
    cat = jnp.concatenate([v, q * v], axis=-1).astype(wc_ref.dtype)      # (M, 2D)
    h = (jnp.dot(cat, wc_ref[...], preferred_element_type=jnp.float32)
         + bc_ref[...])                              # (M, D) f32

    # ELU (alpha=1), in f32.  exp(min(h,0))-1 differs from expm1 by <= f32 eps
    # in absolute terms (kept for guaranteed Mosaic lowering).
    h = jnp.where(h > 0, h, jnp.exp(jnp.minimum(h, 0.0)) - 1.0)

    # attn logits: Linear(D -> 1) as a lane reduce (avoids lane-1 matmul output).
    a = jnp.sum(h * wa_ref[...], axis=-1, keepdims=True) + ba_ref[...]   # (M, 1)

    # softmax over the N axis, per batch row.
    a = a.reshape(TB, N, 1)
    a = a - jnp.max(a, axis=1, keepdims=True)
    e = jnp.exp(a)
    inv = pl.reciprocal(jnp.sum(e, axis=1, keepdims=True), approx=True)  # EUP
    attn = e * inv                                   # (TB, N, 1) f32

    out_ref[...] = (attn * x).astype(out_ref.dtype)  # broadcast (TB,N,1)*(TB,N,2D)


def _pick_tb(B, N, twoD, itemsize, max_rows=512, max_block_bytes=4 << 20):
    """Largest TB dividing B with TB*N <= max_rows, block <= max_block_bytes,
    and (when possible) B//TB >= 2 so both v7x TensorCores get work."""
    best = 1
    for tb in range(1, B + 1):
        if B % tb:
            continue
        if tb * N > max_rows:
            continue
        if tb * N * twoD * itemsize > max_block_bytes:
            continue
        if B >= 2 and B // tb < 2:
            continue
        best = tb
    return best


def feature_aggregation_ll(x, wq, wv, wc, bc, wa, ba, *, use_bf16=True):
    """x: (B, N, 2D).  Weights follow PyTorch Linear shapes (out, in); they are
    transposed / fused here (cheap wrapper glue)."""
    B, N, twoD = x.shape
    D = twoD // 2

    mm_dtype = jnp.bfloat16 if use_bf16 else x.dtype
    wqv = jnp.concatenate([wq.T, wv.T], axis=1).astype(mm_dtype)   # (2D, 2D)
    wc_t = wc.T.astype(mm_dtype)                                    # (2D, D)
    bc2 = bc.reshape(1, D).astype(jnp.float32)
    wa2 = wa.reshape(1, D).astype(jnp.float32)
    ba2 = ba.reshape(1, 1).astype(jnp.float32)

    TB = _pick_tb(B, N, twoD, x.dtype.itemsize)
    grid = (B // TB,)

    block_bytes = TB * N * twoD * x.dtype.itemsize
    weight_bytes = (wqv.size * wqv.dtype.itemsize
                    + wc_t.size * wc_t.dtype.itemsize
                    + (bc2.size + wa2.size + ba2.size) * 4)
    # in+out double-buffered blocks + resident weights + slack; safe on 64 MiB v7x.
    vmem_limit = int(min(max(6 * block_bytes + 2 * weight_bytes + (4 << 20),
                             32 << 20), 48 << 20))

    def full(shp):
        n = len(shp)
        return pl.BlockSpec(shp, lambda b: (0,) * n)

    return pl.pallas_call(
        _feature_agg_kernel,
        out_shape=jax.ShapeDtypeStruct((B, N, twoD), x.dtype),
        grid_spec=pltpu.PrefetchScalarGridSpec(
            num_scalar_prefetch=0,
            grid=grid,
            in_specs=[
                pl.BlockSpec((TB, N, twoD), lambda b: (b, 0, 0)),   # x
                full((twoD, twoD)),   # [Wq^T | Wv^T]
                full((twoD, D)),      # Wc^T
                full((1, D)),         # bc
                full((1, D)),         # wa
                full((1, 1)),         # ba
            ],
            out_specs=pl.BlockSpec((TB, N, twoD), lambda b: (b, 0, 0)),
        ),
        compiler_params=pltpu.CompilerParams(
            dimension_semantics=("parallel",),
            vmem_limit_bytes=vmem_limit),
    )(x, wqv, wc_t, bc2, wa2, ba2)


def _reference(x, wq, wv, wc, bc, wa, ba):
    # Pure-JAX reference mirroring the PyTorch forward (dropout = identity).
    q = x @ wq.T
    v = x @ wv.T
    cat_in = jnp.concatenate([v, q * v], axis=-1)
    h = jax.nn.elu(cat_in @ wc.T + bc)
    a = h @ wa.T + ba                                # (B, N, 1)
    a = jax.nn.softmax(a, axis=1)
    return a * x


if __name__ == "__main__":
    # Small deterministic setup (module_dim = 128 -> input last dim 256).
    D = 128
    B, N = 8, 8
    key = jax.random.PRNGKey(0)
    kx, kq, kv, kc, kbc, ka, kba = jax.random.split(key, 7)

    x = jax.random.normal(kx, (B, N, 2 * D), dtype=jnp.float32)

    # PyTorch Linear parameter shapes: weight (out, in), bias (out,)
    wq = 0.02 * jax.random.normal(kq, (D, 2 * D), dtype=jnp.float32)
    wv = 0.02 * jax.random.normal(kv, (D, 2 * D), dtype=jnp.float32)
    wc = 0.02 * jax.random.normal(kc, (D, 2 * D), dtype=jnp.float32)
    bc = 0.02 * jax.random.normal(kbc, (D,), dtype=jnp.float32)
    wa = 0.02 * jax.random.normal(ka, (1, D), dtype=jnp.float32)
    ba = 0.02 * jax.random.normal(kba, (1,), dtype=jnp.float32)

    ref = _reference(x, wq, wv, wc, bc, wa, ba)

    # f32 matmul operands: tight check (approx reciprocal is the only deviation).
    out_f32 = jax.block_until_ready(
        feature_aggregation_ll(x, wq, wv, wc, bc, wa, ba, use_bf16=False))
    assert out_f32.shape == (B, N, 2 * D)
    assert jnp.allclose(out_f32, ref, atol=5e-3, rtol=5e-3), "f32 path mismatch"

    # bf16 matmul operands (f32 accumulation & elementwise): looser tolerance.
    out_bf16 = jax.block_until_ready(
        feature_aggregation_ll(x, wq, wv, wc, bc, wa, ba, use_bf16=True))
    assert out_bf16.shape == (B, N, 2 * D)
    assert jnp.allclose(out_bf16, ref, atol=2e-2, rtol=2e-2), "bf16 path mismatch"

    print("KERNEL_OK")
</pallas_src>

<mosaic_0001>
module attributes {stable_mosaic.version = 11 : i64} {
  func.func @_feature_agg_kernel(%arg0: i32, %arg1: memref<4x8x256xf32, #tpu.memory_space<vmem>>, %arg2: memref<256x256xf32, #tpu.memory_space<vmem>>, %arg3: memref<256x128xf32, #tpu.memory_space<vmem>>, %arg4: memref<1x128xf32, #tpu.memory_space<vmem>>, %arg5: memref<1x128xf32, #tpu.memory_space<vmem>>, %arg6: memref<1x1xf32, #tpu.memory_space<vmem>>, %arg7: memref<4x8x256xf32, #tpu.memory_space<vmem>>) attributes {dimension_semantics = [#tpu.dimension_semantics<parallel>], iteration_bounds = array<i64: 2>, scalar_prefetch = 0 : i64, scratch_operands = 0 : i64, tpu.core_type = #tpu.core_type<tc>, window_params = [{transform_indices = @transform_0, window_bounds = array<i64: 4, 8, 256>}, {pipeline_mode = #tpu.pipeline_mode<synchronous>, transform_indices = @transform_1, window_bounds = array<i64: 256, 256>}, {pipeline_mode = #tpu.pipeline_mode<synchronous>, transform_indices = @transform_2, window_bounds = array<i64: 256, 128>}, {pipeline_mode = #tpu.pipeline_mode<synchronous>, transform_indices = @transform_3, window_bounds = array<i64: 1, 128>}, {pipeline_mode = #tpu.pipeline_mode<synchronous>, transform_indices = @transform_4, window_bounds = array<i64: 1, 128>}, {pipeline_mode = #tpu.pipeline_mode<synchronous>, transform_indices = @transform_5, window_bounds = array<i64: 1, 1>}, {transform_indices = @transform_6, window_bounds = array<i64: 4, 8, 256>}]} {
    %c0 = arith.constant 0 : index
    %c0_0 = arith.constant 0 : index
    %c0_1 = arith.constant 0 : index
    %0 = vector.load %arg1[%c0, %c0_0, %c0_1] : memref<4x8x256xf32, #tpu.memory_space<vmem>>, vector<4x8x256xf32>
    %1 = vector.shape_cast %0 : vector<4x8x256xf32> to vector<32x256xf32>
    %c0_2 = arith.constant 0 : index
    %c0_3 = arith.constant 0 : index
    %2 = vector.load %arg2[%c0_2, %c0_3] : memref<256x256xf32, #tpu.memory_space<vmem>>, vector<256x256xf32>
    %cst = arith.constant dense<0.000000e+00> : vector<32x256xf32>
    %3 = tpu.matmul %1, %2, %cst {dimension_numbers = #tpu.dot_dimension_numbers<[1], [0], [0], [1], [0, 0, 1, 1], [], []>} : vector<32x256xf32>, vector<256x256xf32>, vector<32x256xf32> -> vector<32x256xf32>
    %4 = vector.extract_strided_slice %3 {offsets = [0, 0], sizes = [32, 128], strides = [1, 1]} : vector<32x256xf32> to vector<32x128xf32>
    %5 = vector.extract_strided_slice %3 {offsets = [0, 128], sizes = [32, 128], strides = [1, 1]} : vector<32x256xf32> to vector<32x128xf32>
    %6 = arith.mulf %4, %5 : vector<32x128xf32>
    %7 = tpu.concatenate %5, %6 in 1 : vector<32x128xf32>, vector<32x128xf32> -> vector<32x256xf32>
    %c0_4 = arith.constant 0 : index
    %c0_5 = arith.constant 0 : index
    %8 = vector.load %arg3[%c0_4, %c0_5] : memref<256x128xf32, #tpu.memory_space<vmem>>, vector<256x128xf32>
    %cst_6 = arith.constant dense<0.000000e+00> : vector<32x128xf32>
    %9 = tpu.matmul %7, %8, %cst_6 {dimension_numbers = #tpu.dot_dimension_numbers<[1], [0], [0], [1], [0, 0, 1, 1], [], []>} : vector<32x256xf32>, vector<256x128xf32>, vector<32x128xf32> -> vector<32x128xf32>
    %c0_7 = arith.constant 0 : index
    %c0_8 = arith.constant 0 : index
    %10 = vector.load %arg4[%c0_7, %c0_8] : memref<1x128xf32, #tpu.memory_space<vmem>>, vector<1x128xf32>
    %11 = vector.broadcast %10 : vector<1x128xf32> to vector<32x128xf32>
    %12 = arith.addf %9, %11 : vector<32x128xf32>
    %cst_9 = arith.constant 0.000000e+00 : f32
    %13 = vector.broadcast %cst_9 : f32 to vector<32x128xf32>
    %14 = arith.cmpf ogt, %12, %13 : vector<32x128xf32>
    %cst_10 = arith.constant 0.000000e+00 : f32
    %15 = vector.broadcast %cst_10 : f32 to vector<32x128xf32>
    %16 = arith.minimumf %12, %15 : vector<32x128xf32>
    %17 = math.exp %16 : vector<32x128xf32>
    %cst_11 = arith.constant 1.000000e+00 : f32
    %18 = vector.broadcast %cst_11 : f32 to vector<32x128xf32>
    %19 = arith.subf %17, %18 : vector<32x128xf32>
    %20 = arith.select %14, %12, %19 : vector<32x128xi1>, vector<32x128xf32>
    %c0_12 = arith.constant 0 : index
    %c0_13 = arith.constant 0 : index
    %21 = vector.load %arg5[%c0_12, %c0_13] : memref<1x128xf32, #tpu.memory_space<vmem>>, vector<1x128xf32>
    %22 = vector.broadcast %21 : vector<1x128xf32> to vector<32x128xf32>
    %23 = arith.mulf %20, %22 : vector<32x128xf32>
    %cst_14 = arith.constant dense<0.000000e+00> : vector<32xf32>
    %24 = vector.multi_reduction <add>, %23, %cst_14 [1] : vector<32x128xf32> to vector<32xf32>
    %25 = vector.shape_cast %24 : vector<32xf32> to vector<32x1xf32>
    %c0_15 = arith.constant 0 : index
    %c0_16 = arith.constant 0 : index
    %26 = vector.load %arg6[%c0_15, %c0_16] : memref<1x1xf32, #tpu.memory_space<vmem>>, vector<1x1xf32>
    %27 = vector.broadcast %26 : vector<1x1xf32> to vector<32x1xf32>
    %28 = arith.addf %25, %27 : vector<32x1xf32>
    %29 = vector.shape_cast %28 : vector<32x1xf32> to vector<4x8x1xf32>
    %cst_17 = arith.constant dense<0xFF800000> : vector<4x1xf32>
    %30 = vector.multi_reduction <maximumf>, %29, %cst_17 [1] : vector<4x8x1xf32> to vector<4x1xf32>
    %31 = vector.shape_cast %30 : vector<4x1xf32> to vector<4x1x1xf32>
    %32 = vector.broadcast %31 : vector<4x1x1xf32> to vector<4x8x1xf32>
    %33 = arith.subf %29, %32 : vector<4x8x1xf32>
    %34 = math.exp %33 : vector<4x8x1xf32>
    %cst_18 = arith.constant dense<0.000000e+00> : vector<4x1xf32>
    %35 = vector.multi_reduction <add>, %34, %cst_18 [1] : vector<4x8x1xf32> to vector<4x1xf32>
    %36 = vector.shape_cast %35 : vector<4x1xf32> to vector<4x1x1xf32>
    %37 = tpu.reciprocal %36 {approx = true} : vector<4x1x1xf32> -> vector<4x1x1xf32>
    %38 = vector.broadcast %37 : vector<4x1x1xf32> to vector<4x8x1xf32>
    %39 = arith.mulf %34, %38 : vector<4x8x1xf32>
    %40 = vector.broadcast %39 : vector<4x8x1xf32> to vector<4x8x256xf32>
    %41 = arith.mulf %40, %0 : vector<4x8x256xf32>
    %c0_19 = arith.constant 0 : index
    %c0_20 = arith.constant 0 : index
    %c0_21 = arith.constant 0 : index
    %42 = vector.load %arg7[%c0_19, %c0_20, %c0_21] : memref<4x8x256xf32, #tpu.memory_space<vmem>>, vector<4x8x256xf32>
    tpu.vector_store %arg7[%c0_19, %c0_20, %c0_21], %41 {strides = array<i32>} : memref<4x8x256xf32, #tpu.memory_space<vmem>>, vector<4x8x256xf32>,
    return
  }
  func.func @transform_0(%arg0: i32) -> (i32, i32, i32) {
    %c0_i32 = arith.constant 0 : i32
    %c0_i32_0 = arith.constant 0 : i32
    %c0_i32_1 = arith.constant 0 : i32
    return %arg0, %c0_i32, %c0_i32_0 : i32, i32, i32
  }
  func.func @transform_1(%arg0: i32) -> (i32, i32) {
    %c0_i32 = arith.constant 0 : i32
    %c0_i32_0 = arith.constant 0 : i32
    %c0_i32_1 = arith.constant 0 : i32
    return %c0_i32, %c0_i32_0 : i32, i32
  }
  func.func @transform_2(%arg0: i32) -> (i32, i32) {
    %c0_i32 = arith.constant 0 : i32
    %c0_i32_0 = arith.constant 0 : i32
    %c0_i32_1 = arith.constant 0 : i32
    return %c0_i32, %c0_i32_0 : i32, i32
  }
  func.func @transform_3(%arg0: i32) -> (i32, i32) {
    %c0_i32 = arith.constant 0 : i32
    %c0_i32_0 = arith.constant 0 : i32
    %c0_i32_1 = arith.constant 0 : i32
    return %c0_i32, %c0_i32_0 : i32, i32
  }
  func.func @transform_4(%arg0: i32) -> (i32, i32) {
    %c0_i32 = arith.constant 0 : i32
    %c0_i32_0 = arith.constant 0 : i32
    %c0_i32_1 = arith.constant 0 : i32
    return %c0_i32, %c0_i32_0 : i32, i32
  }
  func.func @transform_5(%arg0: i32) -> (i32, i32) {
    %c0_i32 = arith.constant 0 : i32
    %c0_i32_0 = arith.constant 0 : i32
    %c0_i32_1 = arith.constant 0 : i32
    return %c0_i32, %c0_i32_0 : i32, i32
  }
  func.func @transform_6(%arg0: i32) -> (i32, i32, i32) {
    %c0_i32 = arith.constant 0 : i32
    %c0_i32_0 = arith.constant 0 : i32
    %c0_i32_1 = arith.constant 0 : i32
    return %arg0, %c0_i32, %c0_i32_0 : i32, i32, i32
  }
}

</mosaic_0001>

<llo_original>
// kernel: tpu_custom_call.1
$region0: #{tpu_custom_call.1}
  #allocation0 [shape = 'u32[]', space=smem, size = 0x4, offset = 0x4, fixed_abs, tag = 'smem constant byte address 0x4 - core index']
  #allocation1 [shape = 'u32[144,128]{1,0:T(1,128)}', space=vmem, size = 0x12000, scoped, tag = 'internal scratch']
  #allocation2 [shape = 'f32[1,1]{1,0:T(1,128)S(1)}', space=vmem, size = 0x200, scoped, tag = 'scoped memory for tpu_custom_call.1']
  %s0 = inlined_call_operand.hbm [shape: f32[8,8,256], index: 0, kind: input, shape index: {}]
  %s1 = inlined_call_operand.hbm [shape: f32[256,256], index: 1, kind: input, shape index: {}]
  %s2 = inlined_call_operand.hbm [shape: f32[256,128], index: 2, kind: input, shape index: {}]
  %s3 = inlined_call_operand.vmem [shape: f32[1,128], index: 3, kind: input, shape index: {}]
  %s4 = inlined_call_operand.vmem [shape: f32[1,128], index: 4, kind: input, shape index: {}]
  %s5 = inlined_call_operand.<no memory space> [shape: f32[1,1], index: 5, kind: input, shape index: {}]
  %s6 = inlined_call_operand.hbm [shape: f32[8,8,256], index: 6, kind: output, shape index: {}]
  %s7 = sld [smem:[#allocation0]]
  $region69: #{tpu_custom_call.1} parent=0
    _
  %s9 = ssub.s32 1, %s7
  %s10 = scalar_select 0, %s9, %s7
  %v11 = vstv %s5
  %12 = vst [vmem:[#allocation2] sm:$0x1] %v11
  $region1: #{tpu_custom_call.1} parent=0
    #allocation3 [shape = 'u8[65536]{0}', space=vmem, size = 0x10000, scoped, tag = 'input window, operand 0']
    #allocation4 [shape = 's32[2]{0}', space=sflag, size = 0x8, scoped, tag = 'scoped memory for tpu_custom_call.1']
    #allocation5 [shape = 's32[2]{0}', space=sflag, size = 0x8, scoped, tag = 'scoped memory for tpu_custom_call.1']
    #allocation6 [shape = 'u8[262144]{0}', space=vmem, size = 0x40000, scoped, tag = 'input window, operand 1, single buffered']
    #allocation7 [shape = 's32[1]{0}', space=sflag, size = 0x4, scoped, tag = 'scoped memory for tpu_custom_call.1']
    #allocation8 [shape = 'u8[131072]{0}', space=vmem, size = 0x20000, scoped, tag = 'input window, operand 2, single buffered']
    #allocation9 [shape = 'u8[65536]{0}', space=vmem, size = 0x10000, scoped, tag = 'output window, operand 0']
    %13 = vsyncpa [#allocation4], 0
    %s14 = scalar_lea.sflag [#allocation4], 1
    %15 = vsyncpa %s14, 0
    %16 = vsyncpa [#allocation7], 0
    %17 = vsyncpa [#allocation5], 0
    %s18 = scalar_lea.sflag [#allocation5], 1
    %19 = vsyncpa %s18, 0
    loop: start=0, step=1, limit=4
    $region2: #{tpu_custom_call.1} parent=1 // loop_pre_header
      _
    $region3: #{tpu_custom_call.1} parent=1 // loop_header
      %s21 = sphi 0, %s25
      %p22 = scmp.ge.s32.totalorder %s21, 4
      %s31 = sphi 0, %s33
      %s34 = sphi 0, %s31
      %s35 = sphi 0, %s34
      %s51 = sphi 0, %s35
      %s55 = sphi 0, %s55
      %s57 = sphi 0, %s55
      %s58 = sphi 0, %s57
      %s72 = sphi 0, %s58
      %s76 = sphi 0, %s76
      %s78 = sphi 0, %s76
      %s79 = sphi 0, %s78
      %s93 = sphi 0, %s79
      %s97 = sphi 0, %s97
      %s99 = sphi 0, %s97
      %s100 = sphi 0, %s99
      %s114 = sphi 0, %s100
      %s118 = sphi 0, %s118
      %s120 = sphi 0, %s118
      %s121 = sphi 0, %s120
      %s135 = sphi 0, %s121
      %s139 = sphi 0, %s139
      %s141 = sphi 0, %s139
      %s142 = sphi 0, %s141
      %s156 = sphi 0, %s142
      %s162 = sphi 0, %s164
      %s165 = sphi 0, %s162
      %s166 = sphi 0, %s165
      %s182 = sphi 0, %s166
    $region4: #{tpu_custom_call.1} parent=1 // loop_header_branch
      %24 = sbr.rel (%p22) target = $region8
    $region5: #{tpu_custom_call.1} parent=1 // loop_body
      %s26 = ssub.s32 %s21, 1
      %s27 = ssub.s32 %s21, 2
      %s28 = sadd.s32 %s21, 1
      %s29 = ssub.s32 %s21, %s28
      %p30 = scmp.eq.s32.totalorder %s29, 0
      %s32 = sadd.s32 %s31, 1
      %s33 = scalar_select %p30, %s31, %s32
      %p36 = pneg %p30
      %p37 = scmp.eq.s32.totalorder %s21, 1
      %p38 = por %p36, %p37
      %p39 = scmp.ne.s32.totalorder %s31, %s34
      %p40 = scmp.eq.s32.totalorder %s21, 0
      %p41 = por %p39, %p40
      %p42 = scmp.ne.s32.totalorder %s31, %s34
      %p43 = scmp.eq.s32.totalorder %s26, 1
      %p44 = por %p42, %p43
      %p45 = scmp.ne.s32.totalorder %s34, %s35
      %p46 = scmp.eq.s32.totalorder %s26, 0
      %p47 = por %p45, %p46
      %p48 = scmp.ne.s32.totalorder %s34, %s35
      %p49 = scmp.eq.s32.totalorder %s27, 1
      %p50 = por %p48, %p49
      %p52 = scmp.ne.s32.totalorder %s35, %s51
      %p53 = scmp.eq.s32.totalorder %s27, 0
      %p54 = por %p52, %p53
      %s56 = sadd.s32 %s55, 1
      %p59 = scmp.eq.s32.totalorder %s21, 1
      %p60 = scmp.ne.s32.totalorder %s55, %s57
      %p61 = scmp.eq.s32.totalorder %s21, 0
      %p62 = por %p60, %p61
      %p63 = scmp.ne.s32.totalorder %s55, %s57
      %p64 = scmp.eq.s32.totalorder %s26, 1
      %p65 = por %p63, %p64
      %p66 = scmp.ne.s32.totalorder %s57, %s58
      %p67 = scmp.eq.s32.totalorder %s26, 0
      %p68 = por %p66, %p67
      %p69 = scmp.ne.s32.totalorder %s57, %s58
      %p70 = scmp.eq.s32.totalorder %s27, 1
      %p71 = por %p69, %p70
      %p73 = scmp.ne.s32.totalorder %s58, %s72
      %p74 = scmp.eq.s32.totalorder %s27, 0
      %p75 = por %p73, %p74
      %s77 = sadd.s32 %s76, 1
      %p80 = scmp.eq.s32.totalorder %s21, 1
      %p81 = scmp.ne.s32.totalorder %s76, %s78
      %p82 = scmp.eq.s32.totalorder %s21, 0
      %p83 = por %p81, %p82
      %p84 = scmp.ne.s32.totalorder %s76, %s78
      %p85 = scmp.eq.s32.totalorder %s26, 1
      %p86 = por %p84, %p85
      %p87 = scmp.ne.s32.totalorder %s78, %s79
      %p88 = scmp.eq.s32.totalorder %s26, 0
      %p89 = por %p87, %p88
      %p90 = scmp.ne.s32.totalorder %s78, %s79
      %p91 = scmp.eq.s32.totalorder %s27, 1
      %p92 = por %p90, %p91
      %p94 = scmp.ne.s32.totalorder %s79, %s93
      %p95 = scmp.eq.s32.totalorder %s27, 0
      %p96 = por %p94, %p95
      %s98 = sadd.s32 %s97, 1
      %p101 = scmp.eq.s32.totalorder %s21, 1
      %p102 = scmp.ne.s32.totalorder %s97, %s99
      %p103 = scmp.eq.s32.totalorder %s21, 0
      %p104 = por %p102, %p103
      %p105 = scmp.ne.s32.totalorder %s97, %s99
      %p106 = scmp.eq.s32.totalorder %s26, 1
      %p107 = por %p105, %p106
      %p108 = scmp.ne.s32.totalorder %s99, %s100
      %p109 = scmp.eq.s32.totalorder %s26, 0
      %p110 = por %p108, %p109
      %p111 = scmp.ne.s32.totalorder %s99, %s100
      %p112 = scmp.eq.s32.totalorder %s27, 1
      %p113 = por %p111, %p112
      %p115 = scmp.ne.s32.totalorder %s100, %s114
      %p116 = scmp.eq.s32.totalorder %s27, 0
      %p117 = por %p115, %p116
      %s119 = sadd.s32 %s118, 1
      %p122 = scmp.eq.s32.totalorder %s21, 1
      %p123 = scmp.ne.s32.totalorder %s118, %s120
      %p124 = scmp.eq.s32.totalorder %s21, 0
      %p125 = por %p123, %p124
      %p126 = scmp.ne.s32.totalorder %s118, %s120
      %p127 = scmp.eq.s32.totalorder %s26, 1
      %p128 = por %p126, %p127
      %p129 = scmp.ne.s32.totalorder %s120, %s121
      %p130 = scmp.eq.s32.totalorder %s26, 0
      %p131 = por %p129, %p130
      %p132 = scmp.ne.s32.totalorder %s120, %s121
      %p133 = scmp.eq.s32.totalorder %s27, 1
      %p134 = por %p132, %p133
      %p136 = scmp.ne.s32.totalorder %s121, %s135
      %p137 = scmp.eq.s32.totalorder %s27, 0
      %p138 = por %p136, %p137
      %s140 = sadd.s32 %s139, 1
      %p143 = scmp.eq.s32.totalorder %s21, 1
      %p144 = scmp.ne.s32.totalorder %s139, %s141
      %p145 = scmp.eq.s32.totalorder %s21, 0
      %p146 = por %p144, %p145
      %p147 = scmp.ne.s32.totalorder %s139, %s141
      %p148 = scmp.eq.s32.totalorder %s26, 1
      %p149 = por %p147, %p148
      %p150 = scmp.ne.s32.totalorder %s141, %s142
      %p151 = scmp.eq.s32.totalorder %s26, 0
      %p152 = por %p150, %p151
      %p153 = scmp.ne.s32.totalorder %s141, %s142
      %p154 = scmp.eq.s32.totalorder %s27, 1
      %p155 = por %p153, %p154
      %p157 = scmp.ne.s32.totalorder %s142, %s156
      %p158 = scmp.eq.s32.totalorder %s27, 0
      %p159 = por %p157, %p158
      %s160 = ssub.s32 %s21, %s28
      %p161 = scmp.eq.s32.totalorder %s160, 0
      %s163 = sadd.s32 %s162, 1
      %s164 = scalar_select %p161, %s162, %s163
      %p167 = pneg %p161
      %p168 = scmp.eq.s32.totalorder %s21, 1
      %p169 = por %p167, %p168
      %p170 = scmp.ne.s32.totalorder %s162, %s165
      %p171 = scmp.eq.s32.totalorder %s21, 0
      %p172 = por %p170, %p171
      %p173 = scmp.ne.s32.totalorder %s162, %s165
      %p174 = scmp.eq.s32.totalorder %s26, 1
      %p175 = por %p173, %p174
      %p176 = scmp.ne.s32.totalorder %s165, %s166
      %p177 = scmp.eq.s32.totalorder %s26, 0
      %p178 = por %p176, %p177
      %p179 = scmp.ne.s32.totalorder %s165, %s166
      %p180 = scmp.eq.s32.totalorder %s27, 1
      %p181 = por %p179, %p180
      %p183 = scmp.ne.s32.totalorder %s166, %s182
      %p184 = scmp.eq.s32.totalorder %s27, 0
      %p185 = por %p183, %p184
      %p186 = scmp.le.s32.totalorder 1, %s21
      %p187 = scmp.lt.s32.totalorder %s21, 3
      %p188 = pnand %p186, %p187
      %p189 = pneg %p188
      // Predicated region
      $region9: #{tpu_custom_call.1} parent=5 // pred_check
        _
      $region10: #{tpu_custom_call.1} parent=5 // pred_check_branch
        %191 = sbr.rel (%p188) target = $region12
      $region11: #{tpu_custom_call.1} parent=5 // pred_region
        %s192 = ssub.s32 %s21, 1
        // Predicated region
        $region13: #{tpu_custom_call.1} parent=11 // pred_check
          %p193 = pneg %p68
        $region14: #{tpu_custom_call.1} parent=11 // pred_check_branch
          %195 = sbr.rel (%p193) target = $region16
        $region15: #{tpu_custom_call.1} parent=11 // pred_region
          %s197 = ssub.s32 8192, 8192
          %198 = vsyncadd [#allocation7], %s197
          %s199 = sshll.u32 [#allocation6], 4
          %s200 = int_to_ptr.vmem [resolvable:$true] %s199
          %205 = dma.hbm_to_vmem [thread:$0]  %s1, 8192, %s200, [#allocation7], 256, 256, 16
        $region16: #{tpu_custom_call.1} parent=11 // pred_fallthru
          _
        // Predicated region
        $region17: #{tpu_custom_call.1} parent=11 // pred_check
          %p206 = pneg %p89
        $region18: #{tpu_custom_call.1} parent=11 // pred_check_branch
          %208 = sbr.rel (%p206) target = $region20
        $region19: #{tpu_custom_call.1} parent=11 // pred_region
          %s210 = ssub.s32 4096, 4096
          %211 = vsyncadd [#allocation7], %s210
          %s212 = sshll.u32 [#allocation8], 4
          %s213 = int_to_ptr.vmem [resolvable:$true] %s212
          %218 = dma.hbm_to_vmem [thread:$0]  %s2, 4096, %s213, [#allocation7], 128, 128, 8
        $region20: #{tpu_custom_call.1} parent=11 // pred_fallthru
          _
        // Predicated region
        $region21: #{tpu_custom_call.1} parent=11 // pred_check
          %p219 = pneg %p110
        $region22: #{tpu_custom_call.1} parent=11 // pred_check_branch
          %221 = sbr.rel (%p219) target = $region24
        $region23: #{tpu_custom_call.1} parent=11 // pred_region
          _
        $region24: #{tpu_custom_call.1} parent=11 // pred_fallthru
          _
        // Predicated region
        $region25: #{tpu_custom_call.1} parent=11 // pred_check
          %p222 = pneg %p131
        $region26: #{tpu_custom_call.1} parent=11 // pred_check_branch
          %224 = sbr.rel (%p222) target = $region28
        $region27: #{tpu_custom_call.1} parent=11 // pred_region
          _
        $region28: #{tpu_custom_call.1} parent=11 // pred_fallthru
          _
        // Predicated region
        $region29: #{tpu_custom_call.1} parent=11 // pred_check
          %p225 = pneg %p152
        $region30: #{tpu_custom_call.1} parent=11 // pred_check_branch
          %227 = sbr.rel (%p225) target = $region32
        $region31: #{tpu_custom_call.1} parent=11 // pred_region
          _
        $region32: #{tpu_custom_call.1} parent=11 // pred_fallthru
          _
      $region12: #{tpu_custom_call.1} parent=5 // pred_fallthru
        _
      %p228 = scmp.lt.s32.totalorder %s21, 2
      // Predicated region
      $region33: #{tpu_custom_call.1} parent=5 // pred_check
        %p229 = pneg %p228
      $region34: #{tpu_custom_call.1} parent=5 // pred_check_branch
        %231 = sbr.rel (%p229) target = $region36
      $region35: #{tpu_custom_call.1} parent=5 // pred_region
        // Predicated region
        $region37: #{tpu_custom_call.1} parent=35 // pred_check
          %p232 = pneg %p41
        $region38: #{tpu_custom_call.1} parent=35 // pred_check_branch
          %234 = sbr.rel (%p232) target = $region40
        $region39: #{tpu_custom_call.1} parent=35 // pred_region
          %s235 = sand.u32 %s31, 1
          %s236 = scalar_lea.sflag [#allocation4], %s235
          %s237 = sand.u32 %s31, 1
          %s238 = smul.addr %s237, 64
          %s239 = scalar_lea.vmem [#allocation3], %s238
          %s240 = smul.u32 4, %s21
          %s242 = ssub.s32 1024, 1024
          %243 = vsyncadd %s236, %s242
          %s244 = smul.addr %s240, 2
          %s245 = smul.addr %s244, 128
          %s246 = scalar_lea.hbm %s0, %s245
          %s247 = sshll.u32 %s239, 4
          %s248 = int_to_ptr.vmem [resolvable:$true] %s247
          %253 = dma.hbm_to_vmem [thread:$0]  %s246, 1024, %s248, %s236, 256, 256, 16
        $region40: #{tpu_custom_call.1} parent=35 // pred_fallthru
          _
      $region36: #{tpu_custom_call.1} parent=5 // pred_fallthru
        _
      %p254 = scmp.le.s32.totalorder 1, %s21
      %p255 = scmp.lt.s32.totalorder %s21, 3
      %p256 = pnand %p254, %p255
      %p257 = pneg %p256
      // Predicated region
      $region41: #{tpu_custom_call.1} parent=5 // pred_check
        _
      $region42: #{tpu_custom_call.1} parent=5 // pred_check_branch
        %259 = sbr.rel (%p256) target = $region44
      $region43: #{tpu_custom_call.1} parent=5 // pred_region
        %s260 = ssub.s32 %s21, 1
        %s261 = sand.u32 %s34, 1
        %s262 = scalar_lea.sflag [#allocation4], %s261
        %s263 = sand.u32 %s34, 1
        %s264 = smul.addr %s263, 64
        %s265 = scalar_lea.vmem [#allocation3], %s264
        // Predicated region
        $region45: #{tpu_custom_call.1} parent=43 // pred_check
          %p266 = pneg %p47
        $region46: #{tpu_custom_call.1} parent=43 // pred_check_branch
          %268 = sbr.rel (%p266) target = $region48
        $region47: #{tpu_custom_call.1} parent=43 // pred_region
          %269 = dma.done %s262, 1024
        $region48: #{tpu_custom_call.1} parent=43 // pred_fallthru
          _
        // Predicated region
        $region49: #{tpu_custom_call.1} parent=43 // pred_check
          %p270 = pneg %p68
        $region50: #{tpu_custom_call.1} parent=43 // pred_check_branch
          %272 = sbr.rel (%p270) target = $region52
        $region51: #{tpu_custom_call.1} parent=43 // pred_region
          %273 = dma.done [#allocation7], 8192
        $region52: #{tpu_custom_call.1} parent=43 // pred_fallthru
          _
        // Predicated region
        $region53: #{tpu_custom_call.1} parent=43 // pred_check
          %p274 = pneg %p89
        $region54: #{tpu_custom_call.1} parent=43 // pred_check_branch
          %276 = sbr.rel (%p274) target = $region56
        $region55: #{tpu_custom_call.1} parent=43 // pred_region
          %277 = dma.done [#allocation7], 4096
        $region56: #{tpu_custom_call.1} parent=43 // pred_fallthru
          _
        %s278 = sand.u32 %s34, 1
        %s279 = scalar_lea.sflag [#allocation4], %s278
        %s280 = sand.u32 %s34, 1
        %s281 = smul.addr %s280, 64
        %s282 = scalar_lea.vmem [#allocation3], %s281
        %p283 = pneg %p47
        %p284 = pneg %p44
        %p285 = pneg %p68
        %p286 = pneg %p65
        %p287 = pneg %p89
        %p288 = pneg %p86
        %p289 = pneg %p110
        %p290 = pneg %p107
        %p291 = pneg %p131
        %p292 = pneg %p128
        %p293 = pneg %p152
        %p294 = pneg %p149
        %p295 = pneg %p178
        %p296 = pneg %p175
        %s297 = sand.u32 %s165, 1
        %s298 = scalar_lea.sflag [#allocation5], %s297
        %s299 = sand.u32 %s165, 1
        %s300 = smul.addr %s299, 64
        %s301 = scalar_lea.vmem [#allocation9], %s300
        %s302 = smul.u32 4, %s26
        %s303 = smul.u32 4, %s26
        %v304 = vld [vmem:[%s265] sm:$0xff]
        %v305 = vld [vmem:[%s265 + $0x8] sm:$0xff]
        %v306 = vld [vmem:[%s265 + $0x10] sm:$0xff]
        %v307 = vld [vmem:[%s265 + $0x18] sm:$0xff]
        %v308 = vld [vmem:[%s265 + $0x20] sm:$0xff]
        %v309 = vld [vmem:[%s265 + $0x28] sm:$0xff]
        %v310 = vld [vmem:[%s265 + $0x30] sm:$0xff]
        %v311 = vld [vmem:[%s265 + $0x38] sm:$0xff]
        %v312 = vld [vmem:[#allocation6] sm:$0xff]
        %v313 = vld [vmem:[#allocation6 + $0x8] sm:$0xff]
        %v314 = vld [vmem:[#allocation6 + $0x10] sm:$0xff]
        %v315 = vld [vmem:[#allocation6 + $0x18] sm:$0xff]
        %v316 = vld [vmem:[#allocation6 + $0x20] sm:$0xff]
        %v317 = vld [vmem:[#allocation6 + $0x28] sm:$0xff]
        %v318 = vld [vmem:[#allocation6 + $0x30] sm:$0xff]
        %v319 = vld [vmem:[#allocation6 + $0x38] sm:$0xff]
        %v320 = vld [vmem:[#allocation6 + $0x40] sm:$0xff]
        %v321 = vld [vmem:[#allocation6 + $0x48] sm:$0xff]
        %v322 = vld [vmem:[#allocation6 + $0x50] sm:$0xff]
        %v323 = vld [vmem:[#allocation6 + $0x58] sm:$0xff]
        %v324 = vld [vmem:[#allocation6 + $0x60] sm:$0xff]
        %v325 = vld [vmem:[#allocation6 + $0x68] sm:$0xff]
        %v326 = vld [vmem:[#allocation6 + $0x70] sm:$0xff]
        %v327 = vld [vmem:[#allocation6 + $0x78] sm:$0xff]
        %v328 = vld [vmem:[#allocation6 + $0x80] sm:$0xff]
        %v329 = vld [vmem:[#allocation6 + $0x88] sm:$0xff]
        %v330 = vld [vmem:[#allocation6 + $0x90] sm:$0xff]
        %v331 = vld [vmem:[#allocation6 + $0x98] sm:$0xff]
        %v332 = vld [vmem:[#allocation6 + $0xa0] sm:$0xff]
        %v333 = vld [vmem:[#allocation6 + $0xa8] sm:$0xff]
        %v334 = vld [vmem:[#allocation6 + $0xb0] sm:$0xff]
        %v335 = vld [vmem:[#allocation6 + $0xb8] sm:$0xff]
        %v336 = vld [vmem:[#allocation6 + $0xc0] sm:$0xff]
        %v337 = vld [vmem:[#allocation6 + $0xc8] sm:$0xff]
        %v338 = vld [vmem:[#allocation6 + $0xd0] sm:$0xff]
        %v339 = vld [vmem:[#allocation6 + $0xd8] sm:$0xff]
        %v340 = vld [vmem:[#allocation6 + $0xe0] sm:$0xff]
        %v341 = vld [vmem:[#allocation6 + $0xe8] sm:$0xff]
        %v342 = vld [vmem:[#allocation6 + $0xf0] sm:$0xff]
        %v343 = vld [vmem:[#allocation6 + $0xf8] sm:$0xff]
        %v344 = vld [vmem:[#allocation6 + $0x100] sm:$0xff]
        %v345 = vld [vmem:[#allocation6 + $0x108] sm:$0xff]
        %v346 = vld [vmem:[#allocation6 + $0x110] sm:$0xff]
        %v347 = vld [vmem:[#allocation6 + $0x118] sm:$0xff]
        %v348 = vld [vmem:[#allocation6 + $0x120] sm:$0xff]
        %v349 = vld [vmem:[#allocation6 + $0x128] sm:$0xff]
        %v350 = vld [vmem:[#allocation6 + $0x130] sm:$0xff]
        %v351 = vld [vmem:[#allocation6 + $0x138] sm:$0xff]
        %v352 = vld [vmem:[#allocation6 + $0x140] sm:$0xff]
        %v353 = vld [vmem:[#allocation6 + $0x148] sm:$0xff]
        %v354 = vld [vmem:[#allocation6 + $0x150] sm:$0xff]
        %v355 = vld [vmem:[#allocation6 + $0x158] sm:$0xff]
        %v356 = vld [vmem:[#allocation6 + $0x160] sm:$0xff]
        %v357 = vld [vmem:[#allocation6 + $0x168] sm:$0xff]
        %v358 = vld [vmem:[#allocation6 + $0x170] sm:$0xff]
        %v359 = vld [vmem:[#allocation6 + $0x178] sm:$0xff]
        %v360 = vld [vmem:[#allocation6 + $0x180] sm:$0xff]
        %v361 = vld [vmem:[#allocation6 + $0x188] sm:$0xff]
        %v362 = vld [vmem:[#allocation6 + $0x190] sm:$0xff]
        %v363 = vld [vmem:[#allocation6 + $0x198] sm:$0xff]
        %v364 = vld [vmem:[#allocation6 + $0x1a0] sm:$0xff]
        %v365 = vld [vmem:[#allocation6 + $0x1a8] sm:$0xff]
        %v366 = vld [vmem:[#allocation6 + $0x1b0] sm:$0xff]
        %v367 = vld [vmem:[#allocation6 + $0x1b8] sm:$0xff]
        %v368 = vld [vmem:[#allocation6 + $0x1c0] sm:$0xff]
        %v369 = vld [vmem:[#allocation6 + $0x1c8] sm:$0xff]
        %v370 = vld [vmem:[#allocation6 + $0x1d0] sm:$0xff]
        %v371 = vld [vmem:[#allocation6 + $0x1d8] sm:$0xff]
        %v372 = vld [vmem:[#allocation6 + $0x1e0] sm:$0xff]
        %v373 = vld [vmem:[#allocation6 + $0x1e8] sm:$0xff]
        %v374 = vld [vmem:[#allocation6 + $0x1f0] sm:$0xff]
        %v375 = vld [vmem:[#allocation6 + $0x1f8] sm:$0xff]
        %376 = vmatprep.subr.mxu0 %v343
        %377 = vmatpush1.msra.mxu0 %v342
        %378 = vmatprep.subr.mxu0 %v341
        %379 = vmatpush1.msra.mxu0 %v340
        %380 = vmatprep.subr.mxu0 %v339
        %381 = vmatpush1.msra.mxu0 %v338
        %382 = vmatprep.subr.mxu0 %v337
        %383 = vmatpush1.msra.mxu0 %v336
        %384 = vmatprep.subr.mxu0 %v335
        %385 = vmatpush1.msra.mxu0 %v334
        %386 = vmatprep.subr.mxu0 %v333
        %387 = vmatpush1.msra.mxu0 %v332
        %388 = vmatprep.subr.mxu0 %v331
        %389 = vmatpush1.msra.mxu0 %v330
        %390 = vmatprep.subr.mxu0 %v329
        %391 = vmatpush1.msra.mxu0 %v328
        %392 = vmatprep.subr.mxu0 %v327
        %393 = vmatpush1.msra.mxu0 %v326
        %394 = vmatprep.subr.mxu0 %v325
        %395 = vmatpush1.msra.mxu0 %v324
        %396 = vmatprep.subr.mxu0 %v323
        %397 = vmatpush1.msra.mxu0 %v322
        %398 = vmatprep.subr.mxu0 %v321
        %399 = vmatpush1.msra.mxu0 %v320
        %400 = vmatprep.subr.mxu0 %v319
        %401 = vmatpush1.msra.mxu0 %v318
        %402 = vmatprep.subr.mxu0 %v317
        %403 = vmatpush1.msra.mxu0 %v316
        %404 = vmatprep.subr.mxu0 %v315
        %405 = vmatpush1.msra.mxu0 %v314
        %406 = vmatprep.subr.mxu0 %v313
        %407 = vmatpush1.msra.mxu0 %v312
        %408 = vmatprep.subr.mxu0 %v375
        %409 = vmatpush2.msra.mxu0 %v374
        %410 = vmatprep.subr.mxu0 %v373
        %411 = vmatpush2.msra.mxu0 %v372
        %412 = vmatprep.subr.mxu0 %v371
        %413 = vmatpush2.msra.mxu0 %v370
        %414 = vmatprep.subr.mxu0 %v369
        %415 = vmatpush2.msra.mxu0 %v368
        %416 = vmatprep.subr.mxu0 %v367
        %417 = vmatpush2.msra.mxu0 %v366
        %418 = vmatprep.subr.mxu0 %v365
        %419 = vmatpush2.msra.mxu0 %v364
        %420 = vmatprep.subr.mxu0 %v363
        %421 = vmatpush2.msra.mxu0 %v362
        %422 = vmatprep.subr.mxu0 %v361
        %423 = vmatpush2.msra.mxu0 %v360
        %424 = vmatprep.subr.mxu0 %v359
        %425 = vmatpush2.msra.mxu0 %v358
        %426 = vmatprep.subr.mxu0 %v357
        %427 = vmatpush2.msra.mxu0 %v356
        %428 = vmatprep.subr.mxu0 %v355
        %429 = vmatpush2.msra.mxu0 %v354
        %430 = vmatprep.subr.mxu0 %v353
        %431 = vmatpush2.msra.mxu0 %v352
        %432 = vmatprep.subr.mxu0 %v351
        %433 = vmatpush2.msra.mxu0 %v350
        %434 = vmatprep.subr.mxu0 %v349
        %435 = vmatpush2.msra.mxu0 %v348
        %436 = vmatprep.subr.mxu0 %v347
        %437 = vmatpush2.msra.mxu0 %v346
        %438 = vmatprep.subr.mxu0 %v345
        %439 = vmatpush2.msra.mxu0 %v344
        %440 = vmatprep.mubr.f32.mxu0 %v305
        %441 = vmatmul.mubr.f32.gmra.mxu0 %v304
        %v442 = vpop.f32.mrf.mxu0
        %v443 = vadd.f32 0.0, %v442
        %v444 = vpop.f32.mrf.mxu0
        %v445 = vadd.f32 0.0, %v444
        %446 = vmatprep.mubr.f32.mxu0 %v307
        %447 = vmatmul.mubr.f32.gmra.mxu0 %v306
        %v448 = vpop.f32.mrf.mxu0
        %v449 = vadd.f32 0.0, %v448
        %v450 = vpop.f32.mrf.mxu0
        %v451 = vadd.f32 0.0, %v450
        %452 = vmatprep.mubr.f32.mxu0 %v309
        %453 = vmatmul.mubr.f32.gmra.mxu0 %v308
        %v454 = vpop.f32.mrf.mxu0
        %v455 = vadd.f32 0.0, %v454
        %v456 = vpop.f32.mrf.mxu0
        %v457 = vadd.f32 0.0, %v456
        %458 = vmatprep.mubr.f32.mxu0 %v311
        %459 = vmatmul.mubr.f32.gmra.mxu0 %v310
        %v460 = vpop.f32.mrf.mxu0
        %v461 = vadd.f32 0.0, %v460
        %v462 = vpop.f32.mrf.mxu0
        %v463 = vadd.f32 0.0, %v462
        %464 = vdwg.mxu0
        %v465 = vmul.f32 %v443, %v445
        %v466 = vmul.f32 %v449, %v451
        %v467 = vmul.f32 %v455, %v457
        %v468 = vmul.f32 %v461, %v463
        %v469 = vld [vmem:[#allocation8] sm:$0xff]
        %v470 = vld [vmem:[#allocation8 + $0x8] sm:$0xff]
        %v471 = vld [vmem:[#allocation8 + $0x10] sm:$0xff]
        %v472 = vld [vmem:[#allocation8 + $0x18] sm:$0xff]
        %v473 = vld [vmem:[#allocation8 + $0x20] sm:$0xff]
        %v474 = vld [vmem:[#allocation8 + $0x28] sm:$0xff]
        %v475 = vld [vmem:[#allocation8 + $0x30] sm:$0xff]
        %v476 = vld [vmem:[#allocation8 + $0x38] sm:$0xff]
        %v477 = vld [vmem:[#allocation8 + $0x40] sm:$0xff]
        %v478 = vld [vmem:[#allocation8 + $0x48] sm:$0xff]
        %v479 = vld [vmem:[#allocation8 + $0x50] sm:$0xff]
        %v480 = vld [vmem:[#allocation8 + $0x58] sm:$0xff]
        %v481 = vld [vmem:[#allocation8 + $0x60] sm:$0xff]
        %v482 = vld [vmem:[#allocation8 + $0x68] sm:$0xff]
        %v483 = vld [vmem:[#allocation8 + $0x70] sm:$0xff]
        %v484 = vld [vmem:[#allocation8 + $0x78] sm:$0xff]
        %v485 = vld [vmem:[#allocation8 + $0x80] sm:$0xff]
        %v486 = vld [vmem:[#allocation8 + $0x88] sm:$0xff]
        %v487 = vld [vmem:[#allocation8 + $0x90] sm:$0xff]
        %v488 = vld [vmem:[#allocation8 + $0x98] sm:$0xff]
        %v489 = vld [vmem:[#allocation8 + $0xa0] sm:$0xff]
        %v490 = vld [vmem:[#allocation8 + $0xa8] sm:$0xff]
        %v491 = vld [vmem:[#allocation8 + $0xb0] sm:$0xff]
        %v492 = vld [vmem:[#allocation8 + $0xb8] sm:$0xff]
        %v493 = vld [vmem:[#allocation8 + $0xc0] sm:$0xff]
        %v494 = vld [vmem:[#allocation8 + $0xc8] sm:$0xff]
        %v495 = vld [vmem:[#allocation8 + $0xd0] sm:$0xff]
        %v496 = vld [vmem:[#allocation8 + $0xd8] sm:$0xff]
        %v497 = vld [vmem:[#allocation8 + $0xe0] sm:$0xff]
        %v498 = vld [vmem:[#allocation8 + $0xe8] sm:$0xff]
        %v499 = vld [vmem:[#allocation8 + $0xf0] sm:$0xff]
        %v500 = vld [vmem:[#allocation8 + $0xf8] sm:$0xff]
        %v501 = vld [vmem:[%s3] sm:$0x1]
        %v503 = vlaneseq
        %v504 = vshrl.u32 %v503, 7
        %v505 = vsub.s32 0, %v504
        %v506 = vrot.slane %v501, %v505
        %508 = vmatprep.subr.mxu0 0.0
        %509 = vmatpush1.msra.mxu0 %v484
        %510 = vmatprep.subr.mxu0 0.0
        %511 = vmatpush1.msra.mxu0 %v483
        %512 = vmatprep.subr.mxu0 0.0
        %513 = vmatpush1.msra.mxu0 %v482
        %514 = vmatprep.subr.mxu0 0.0
        %515 = vmatpush1.msra.mxu0 %v481
        %516 = vmatprep.subr.mxu0 0.0
        %517 = vmatpush1.msra.mxu0 %v480
        %518 = vmatprep.subr.mxu0 0.0
        %519 = vmatpush1.msra.mxu0 %v479
        %520 = vmatprep.subr.mxu0 0.0
        %521 = vmatpush1.msra.mxu0 %v478
        %522 = vmatprep.subr.mxu0 0.0
        %523 = vmatpush1.msra.mxu0 %v477
        %524 = vmatprep.subr.mxu0 0.0
        %525 = vmatpush1.msra.mxu0 %v476
        %526 = vmatprep.subr.mxu0 0.0
        %527 = vmatpush1.msra.mxu0 %v475
        %528 = vmatprep.subr.mxu0 0.0
        %529 = vmatpush1.msra.mxu0 %v474
        %530 = vmatprep.subr.mxu0 0.0
        %531 = vmatpush1.msra.mxu0 %v473
        %532 = vmatprep.subr.mxu0 0.0
        %533 = vmatpush1.msra.mxu0 %v472
        %534 = vmatprep.subr.mxu0 0.0
        %535 = vmatpush1.msra.mxu0 %v471
        %536 = vmatprep.subr.mxu0 0.0
        %537 = vmatpush1.msra.mxu0 %v470
        %538 = vmatprep.subr.mxu0 0.0
        %539 = vmatpush1.msra.mxu0 %v469
        %540 = vmatprep.subr.mxu0 0.0
        %541 = vmatpush2.msra.mxu0 %v500
        %542 = vmatprep.subr.mxu0 0.0
        %543 = vmatpush2.msra.mxu0 %v499
        %544 = vmatprep.subr.mxu0 0.0
        %545 = vmatpush2.msra.mxu0 %v498
        %546 = vmatprep.subr.mxu0 0.0
        %547 = vmatpush2.msra.mxu0 %v497
        %548 = vmatprep.subr.mxu0 0.0
        %549 = vmatpush2.msra.mxu0 %v496
        %550 = vmatprep.subr.mxu0 0.0
        %551 = vmatpush2.msra.mxu0 %v495
        %552 = vmatprep.subr.mxu0 0.0
        %553 = vmatpush2.msra.mxu0 %v494
        %554 = vmatprep.subr.mxu0 0.0
        %555 = vmatpush2.msra.mxu0 %v493
        %556 = vmatprep.subr.mxu0 0.0
        %557 = vmatpush2.msra.mxu0 %v492
        %558 = vmatprep.subr.mxu0 0.0
        %559 = vmatpush2.msra.mxu0 %v491
        %560 = vmatprep.subr.mxu0 0.0
        %561 = vmatpush2.msra.mxu0 %v490
        %562 = vmatprep.subr.mxu0 0.0
        %563 = vmatpush2.msra.mxu0 %v489
        %564 = vmatprep.subr.mxu0 0.0
        %565 = vmatpush2.msra.mxu0 %v488
        %566 = vmatprep.subr.mxu0 0.0
        %567 = vmatpush2.msra.mxu0 %v487
        %568 = vmatprep.subr.mxu0 0.0
        %569 = vmatpush2.msra.mxu0 %v486
        %570 = vmatprep.subr.mxu0 0.0
        %571 = vmatpush2.msra.mxu0 %v485
        %572 = vmatprep.mubr.f32.mxu0 %v465
        %573 = vmatmul.mubr.f32.gmra.mxu0 %v445
        %v574 = vpop.f32.mrf.mxu0
        %v575 = vadd.f32 %v506, %v574
        %v576 = vpop.f32.mrf.mxu0
        %577 = vmatprep.mubr.f32.mxu0 %v466
        %578 = vmatmul.mubr.f32.gmra.mxu0 %v451
        %v579 = vpop.f32.mrf.mxu0
        %v580 = vadd.f32 %v506, %v579
        %v581 = vpop.f32.mrf.mxu0
        %582 = vmatprep.mubr.f32.mxu0 %v467
        %583 = vmatmul.mubr.f32.gmra.mxu0 %v457
        %v584 = vpop.f32.mrf.mxu0
        %v585 = vadd.f32 %v506, %v584
        %v586 = vpop.f32.mrf.mxu0
        %587 = vmatprep.mubr.f32.mxu0 %v468
        %588 = vmatmul.mubr.f32.gmra.mxu0 %v463
        %v589 = vpop.f32.mrf.mxu0
        %v590 = vadd.f32 %v506, %v589
        %v591 = vpop.f32.mrf.mxu0
        %592 = vdwg.mxu0
        %vm593 = vcmp.gt.f32.partialorder %v575, 0.0
        %vm594 = vcmp.gt.f32.partialorder %v580, 0.0
        %vm595 = vcmp.gt.f32.partialorder %v585, 0.0
        %vm596 = vcmp.gt.f32.partialorder %v590, 0.0
        %v597 = vmin.f32 %v575, 0.0
        %v598 = vmin.f32 %v580, 0.0
        %v599 = vmin.f32 %v585, 0.0
        %v600 = vmin.f32 %v590, 0.0
        %v601 = vmul.f32 %v597, 1.442695
        %v602 = vpow.pop %v601
        %v603 = vmul.f32 %v598, 1.442695
        %v604 = vpow.pop %v603
        %v605 = vmul.f32 %v599, 1.442695
        %v606 = vpow.pop %v605
        %v607 = vmul.f32 %v600, 1.442695
        %v608 = vpow.pop %v607
        %v609 = vsub.f32 %v602, 1.0
        %v610 = vsub.f32 %v604, 1.0
        %v611 = vsub.f32 %v606, 1.0
        %v612 = vsub.f32 %v608, 1.0
        %v613 = vsel %vm593, %v575, %v609
        %v614 = vsel %vm594, %v580, %v610
        %v615 = vsel %vm595, %v585, %v611
        %v616 = vsel %vm596, %v590, %v612
        %v617 = vld [vmem:[%s4] sm:$0x1]
        %v619 = vlaneseq
        %v620 = vshrl.u32 %v619, 7
        %v621 = vsub.s32 0, %v620
        %v622 = vrot.slane %v617, %v621
        %v624 = vmul.f32 %v613, %v622
        %v625 = vmul.f32 %v614, %v622
        %v626 = vmul.f32 %v615, %v622
        %v627 = vmul.f32 %v616, %v622
        %628 = vadd.xlane.f32.xlu0 %v624
        %v629 = vpop.xlane.xlu0 %628
        %630 = vadd.xlane.f32.xlu0 %v625
        %v631 = vpop.xlane.xlu0 %630
        %632 = vadd.xlane.f32.xlu0 %v626
        %v633 = vpop.xlane.xlu0 %632
        %634 = vadd.xlane.f32.xlu0 %v627
        %v635 = vpop.xlane.xlu0 %634
        %v636 = vld [vmem:[#allocation2] sm:$0x1]
        %v638 = vlaneseq
        %v639 = vshrl.u32 %v638, 7
        %v640 = vsub.s32 0, %v639
        %v641 = vrot.slane %v636, %v640
        %v643 = vadd.f32 %v629, %v641
        %v644 = vadd.f32 %v631, %v641
        %v645 = vadd.f32 %v633, %v641
        %v646 = vadd.f32 %v635, %v641
        %vm647 = vcmask 7168
        %v648 = vsel %vm647, %v643, -inf
        %v649 = vrot.slane %v648, 4
        %v650 = vmax.f32 %v648, %v649
        %v651 = vrot.slane %v650, 2
        %v652 = vmax.f32 %v650, %v651
        %v653 = vrot.slane %v652, 1
        %v654 = vmax.f32 %v652, %v653
        %v655 = vsel %vm647, %v644, -inf
        %v656 = vrot.slane %v655, 4
        %v657 = vmax.f32 %v655, %v656
        %v658 = vrot.slane %v657, 2
        %v659 = vmax.f32 %v657, %v658
        %v660 = vrot.slane %v659, 1
        %v661 = vmax.f32 %v659, %v660
        %v662 = vsel %vm647, %v645, -inf
        %v663 = vrot.slane %v662, 4
        %v664 = vmax.f32 %v662, %v663
        %v665 = vrot.slane %v664, 2
        %v666 = vmax.f32 %v664, %v665
        %v667 = vrot.slane %v666, 1
        %v668 = vmax.f32 %v666, %v667
        %v669 = vsel %vm647, %v646, -inf
        %v670 = vrot.slane %v669, 4
        %v671 = vmax.f32 %v669, %v670
        %v672 = vrot.slane %v671, 2
        %v673 = vmax.f32 %v671, %v672
        %v674 = vrot.slane %v673, 1
        %v675 = vmax.f32 %v673, %v674
        %v676 = vsub.f32 %v643, %v654
        %v677 = vsub.f32 %v644, %v661
        %v678 = vsub.f32 %v645, %v668
        %v679 = vsub.f32 %v646, %v675
        %v680 = vmul.f32 %v676, 1.442695
        %v681 = vpow.pop %v680
        %v682 = vmul.f32 %v677, 1.442695
        %v683 = vpow.pop %v682
        %v684 = vmul.f32 %v678, 1.442695
        %v685 = vpow.pop %v684
        %v686 = vmul.f32 %v679, 1.442695
        %v687 = vpow.pop %v686
        %v688 = vsel %vm647, %v681, 0.0
        %v689 = vrot.slane %v688, 4
        %v690 = vadd.f32 %v688, %v689
        %v691 = vrot.slane %v690, 2
        %v692 = vadd.f32 %v690, %v691
        %v693 = vrot.slane %v692, 1
        %v694 = vadd.f32 %v692, %v693
        %v695 = vsel %vm647, %v683, 0.0
        %v696 = vrot.slane %v695, 4
        %v697 = vadd.f32 %v695, %v696
        %v698 = vrot.slane %v697, 2
        %v699 = vadd.f32 %v697, %v698
        %v700 = vrot.slane %v699, 1
        %v701 = vadd.f32 %v699, %v700
        %v702 = vsel %vm647, %v685, 0.0
        %v703 = vrot.slane %v702, 4
        %v704 = vadd.f32 %v702, %v703
        %v705 = vrot.slane %v704, 2
        %v706 = vadd.f32 %v704, %v705
        %v707 = vrot.slane %v706, 1
        %v708 = vadd.f32 %v706, %v707
        %v709 = vsel %vm647, %v687, 0.0
        %v710 = vrot.slane %v709, 4
        %v711 = vadd.f32 %v709, %v710
        %v712 = vrot.slane %v711, 2
        %v713 = vadd.f32 %v711, %v712
        %v714 = vrot.slane %v713, 1
        %v715 = vadd.f32 %v713, %v714
        %v716 = vrcp.pop %v694
        %v717 = vrcp.pop %v701
        %v718 = vrcp.pop %v708
        %v719 = vrcp.pop %v715
        %v720 = vmul.f32 %v681, %v716
        %v721 = vmul.f32 %v683, %v717
        %v722 = vmul.f32 %v685, %v718
        %v723 = vmul.f32 %v687, %v719
        %725 = vset.pattern.permute.xlu0 0
        %726 = vperm.xlu0 %725, %v720
        %v727 = vpop.permute.xlu0 %726
        %730 = vset.pattern.permute.xlu0 0
        %731 = vperm.xlu0 %730, %v721
        %v732 = vpop.permute.xlu0 %731
        %735 = vset.pattern.permute.xlu0 0
        %736 = vperm.xlu0 %735, %v722
        %v737 = vpop.permute.xlu0 %736
        %740 = vset.pattern.permute.xlu0 0
        %741 = vperm.xlu0 %740, %v723
        %v742 = vpop.permute.xlu0 %741
        %v744 = vmul.f32 %v727, %v304
        %v745 = vmul.f32 %v727, %v305
        %v746 = vmul.f32 %v732, %v306
        %v747 = vmul.f32 %v732, %v307
        %v748 = vmul.f32 %v737, %v308
        %v749 = vmul.f32 %v737, %v309
        %v750 = vmul.f32 %v742, %v310
        %v751 = vmul.f32 %v742, %v311
        %752 = vst [vmem:[%s301] sm:$0xff] %v744
        %753 = vst [vmem:[%s301 + $0x8] sm:$0xff] %v745
        %754 = vst [vmem:[%s301 + $0x10] sm:$0xff] %v746
        %755 = vst [vmem:[%s301 + $0x18] sm:$0xff] %v747
        %756 = vst [vmem:[%s301 + $0x20] sm:$0xff] %v748
        %757 = vst [vmem:[%s301 + $0x28] sm:$0xff] %v749
        %758 = vst [vmem:[%s301 + $0x30] sm:$0xff] %v750
        %759 = vst [vmem:[%s301 + $0x38] sm:$0xff] %v751
        %s760 = sand.u32 %s165, 1
        %s761 = scalar_lea.sflag [#allocation5], %s760
        %s762 = sand.u32 %s165, 1
        %s763 = smul.addr %s762, 64
        %s764 = scalar_lea.vmem [#allocation9], %s763
        // Predicated region
        $region57: #{tpu_custom_call.1} parent=43 // pred_check
          %p765 = pneg %p175
        $region58: #{tpu_custom_call.1} parent=43 // pred_check_branch
          %767 = sbr.rel (%p765) target = $region60
        $region59: #{tpu_custom_call.1} parent=43 // pred_region
          %s768 = smul.u32 4, %s26
          %s770 = ssub.s32 1024, 1024
          %771 = vsyncadd %s761, %s770
          %s772 = smul.addr %s768, 2
          %s773 = smul.addr %s772, 128
          %s774 = scalar_lea.hbm %s6, %s773
          %s775 = sshll.u32 %s764, 4
          %s776 = int_to_ptr.vmem [resolvable:$true] %s775
          %781 = dma.vmem_to_hbm [thread:$0]  %s776, 1024, %s774, %s761, 256, 256, 16
        $region60: #{tpu_custom_call.1} parent=43 // pred_fallthru
          _
      $region44: #{tpu_custom_call.1} parent=5 // pred_fallthru
        _
      %p782 = scmp.le.s32.totalorder 2, %s21
      // Predicated region
      $region61: #{tpu_custom_call.1} parent=5 // pred_check
        %p783 = pneg %p782
      $region62: #{tpu_custom_call.1} parent=5 // pred_check_branch
        %785 = sbr.rel (%p783) target = $region64
      $region63: #{tpu_custom_call.1} parent=5 // pred_region
        %s786 = ssub.s32 %s21, 2
        // Predicated region
        $region65: #{tpu_custom_call.1} parent=63 // pred_check
          %p787 = pneg %p181
        $region66: #{tpu_custom_call.1} parent=63 // pred_check_branch
          %789 = sbr.rel (%p787) target = $region68
        $region67: #{tpu_custom_call.1} parent=63 // pred_region
          %s790 = sand.u32 %s166, 1
          %s791 = scalar_lea.sflag [#allocation5], %s790
          %s792 = sand.u32 %s166, 1
          %s793 = smul.addr %s792, 64
          %s794 = scalar_lea.vmem [#allocation9], %s793
          %795 = dma.done %s791, 1024
        $region68: #{tpu_custom_call.1} parent=63 // pred_fallthru
          _
      $region64: #{tpu_custom_call.1} parent=5 // pred_fallthru
        _
    $region6: #{tpu_custom_call.1} parent=1 // loop_footer
      %s25 = sadd.s32 1, %s21
    $region7: #{tpu_custom_call.1} parent=1 // loop_footer_branch
      %20 = sbr.rel target = $region3
    $region8: #{tpu_custom_call.1} parent=1 // loop_exit
      _
    %796 = vsyncpa [#allocation4], 1
    %s797 = scalar_lea.sflag [#allocation4], 1
    %798 = vsyncpa %s797, 1
    %799 = vsyncpa [#allocation7], 1
    %800 = vsyncpa [#allocation5], 1
    %s801 = scalar_lea.sflag [#allocation5], 1
    %802 = vsyncpa %s801, 1

</llo_original>
